<compile_context>
chip_gen: v6e
topology: v6e:2x2x1
jax: 0.10.0
libtpu: 0.0.40
codegen_flags: <defaults>
</compile_context>

<pallas_src>
import jax
import jax.numpy as jnp
import numpy as np
from jax import lax
from jax.experimental import pallas as pl
from jax.experimental.pallas import tpu as pltpu


# ----------------------------------------------------------------------------
# Kernel (closure over the static sizes S, B, H)
# ----------------------------------------------------------------------------
def _make_kernel(S, B, H):
    SB = S * B

    def kernel(a_ref, w_ref, b_ref, out_ref):
        # a_ref : (3*S*B, H)  rows [0:SB)=facts, [SB:2SB)=q tiled, [2SB:3SB)=m tiled
        # w_ref : (9H, 2H)    rows [0:5H)=blockdiag(W1,Wg), [5H:6H)=[U|0], [6H:9H)=[Wm|0]
        # b_ref : (8, 2H)     row0=[b1|bW+bU], row1=[w2^T|0], row2=[b2|0], row3=[bM|0]
        f = a_ref[0:SB, :]                         # (SB, H)
        qt = a_ref[SB:2 * SB, :]                   # (SB, H)
        mt = a_ref[2 * SB:3 * SB, :]               # (SB, H)

        # ----- attention features + facts-side GRU matmul, fused (one MXU op) -
        # zf = [f*q, f*m, |f-q|, |f-m|, f]  (SB, 5H)
        # Wbig = [[W1, 0], [0, Wg]]          (5H, 2H)  -> res = [g_pre | fw]
        zf = jnp.concatenate(
            [f * qt, f * mt, jnp.abs(f - qt), jnp.abs(f - mt), f], axis=1)
        res = (jnp.dot(zf, w_ref[0:5 * H, :],
                       preferred_element_type=jnp.float32)
               + b_ref[0:1, :])                    # (SB, 2H)
        res3 = res.reshape(S, B, 2 * H)            # one-time split for per-step idx
        g3 = jnp.tanh(res3[:, :, 0:H])             # (S, B, H)
        fw3 = res3[:, :, H:2 * H]                  # (S, B, H) = facts@W + bW + bU

        # ----- attention gates: softmax over the *batch* axis (ref semantics) -
        w2row = b_ref[1:2, 0:H]                    # (1, H)  W2 as a row
        b2 = b_ref[2:3, 0:1]                       # (1, 1)
        logits = jnp.sum(g3 * w2row, axis=2, keepdims=True) + b2   # (S, B, 1)
        mx = jnp.max(logits, axis=1, keepdims=True)
        e = jnp.exp(logits - mx)
        denom = jnp.sum(e, axis=1, keepdims=True)
        gates3 = e * pl.reciprocal(denom, approx=True)              # (S, B, 1)

        # ----- AttentionGRU recurrence (serial over S) -----------------------
        ug = w_ref[5 * H:6 * H, 0:H]               # (H, H), loaded once
        # Step 0: hidden == 0 -> skip hidden@U on the critical path.
        h_hat = jnp.tanh(fw3[0])
        hidden = gates3[0] * h_hat
        for s in range(1, S):                      # static unroll (S small)
            h_hat = jnp.tanh(
                fw3[s]
                + jnp.dot(hidden, ug, preferred_element_type=jnp.float32))
            hidden = hidden + gates3[s] * (h_hat - hidden)
        # TODO(synk): if this serial loop ever dominates, hold U staged in the
        # MXU via pltpu.matmul_push_rhs / matmul_acc_lhs / matmul_pop instead
        # of S-1 independent push/pop round-trips.

        # ----- memory update --------------------------------------------------
        q = a_ref[SB:SB + B, :]                    # first tile of qt == q
        m = a_ref[2 * SB:2 * SB + B, :]            # first tile of mt == m
        mw = w_ref[6 * H:9 * H, 0:H]               # (3H, H)
        bm = b_ref[3:4, 0:H]                       # (1, H)
        concat = jnp.concatenate([m, hidden, q], axis=1)     # (B, 3H)
        nextM = (jnp.dot(concat, mw, preferred_element_type=jnp.float32) + bm)
        out_ref[...] = jnp.maximum(nextM, 0.0)     # (B, H) sub-128-lane store, OK

    return kernel


# ----------------------------------------------------------------------------
# One-time parameter packing (outside the hot path)
# ----------------------------------------------------------------------------
def pack_params(params):
    H = params["u"].shape[0]
    f32 = jnp.float32
    z = lambda r, c: jnp.zeros((r, c), f32)

    # Block-diagonal fused weight: [z | facts] @ [[W1, 0], [0, W]] -> [g_pre | fw]
    wbig = jnp.concatenate(
        [jnp.concatenate([params["w1"], z(4 * H, H)], axis=1),
         jnp.concatenate([z(H, H), params["w"]], axis=1)], axis=0)    # (5H, 2H)
    ug_pad = jnp.concatenate([params["u"], z(H, H)], axis=1)          # (H, 2H)
    mw_pad = jnp.concatenate([params["mw"], z(3 * H, H)], axis=1)     # (3H, 2H)
    wpack = jnp.concatenate([wbig, ug_pad, mw_pad], axis=0)           # (9H, 2H)

    bpack = jnp.concatenate([
        jnp.concatenate([params["b1"], params["b_w"] + params["b_u"]], axis=1),
        jnp.concatenate([params["w2"].reshape(1, H), z(1, H)], axis=1),
        jnp.concatenate([params["b2"].reshape(1, 1), z(1, 2 * H - 1)], axis=1),
        jnp.concatenate([params["b_m"], z(1, H)], axis=1),
        z(4, 2 * H),
    ], axis=0)                                                        # (8, 2H)
    return wpack.astype(f32), bpack.astype(f32)


# ----------------------------------------------------------------------------
# Wrapper
# ----------------------------------------------------------------------------
@jax.jit
def memory_module(facts, questions, prevM, wpack, bpack):
    S, B, H = facts.shape
    q = questions.reshape(B, H)
    m = prevM.reshape(B, H)
    # Layout plumbing in the wrapper/HBM: flatten facts to (S*B, H), pre-tile
    # q/m over S, pack into ONE buffer -> one DMA, only static slices in-kernel.
    apack = jnp.concatenate(
        [facts.reshape(S * B, H), jnp.tile(q, (S, 1)), jnp.tile(m, (S, 1))],
        axis=0)                                                       # (3*S*B, H)

    vmem = pl.BlockSpec(memory_space=pltpu.MemorySpace.VMEM)
    out = pl.pallas_call(
        _make_kernel(S, B, H),
        out_shape=jax.ShapeDtypeStruct((B, H), jnp.float32),
        in_specs=[vmem, vmem, vmem],
        out_specs=vmem,
        # TODO(synk): for multi-hop DMN, fuse hops into one call (grid over
        # hops) or alias prevM/out via input_output_aliases; if H/S/B scale up,
        # add a grid + BlockSpecs and re-derive tiles against v7x's 64 MiB VMEM
        # with an explicit vmem_limit_bytes.
    )(apack, wpack, bpack)
    return out[None]   # (1, B, H) == nextM.unsqueeze(0)


# ----------------------------------------------------------------------------
# Deterministic synthetic parameters (xavier-normal weights, uniform biases)
# ----------------------------------------------------------------------------
def _xavier(key, fan_in, fan_out):
    std = (2.0 / (fan_in + fan_out)) ** 0.5
    return (std * jax.random.normal(key, (fan_in, fan_out))).astype(jnp.float32)


def _bias(key, fan_in, n):
    bound = 1.0 / (fan_in ** 0.5)
    return jax.random.uniform(key, (1, n), jnp.float32, -bound, bound)


def init_params(key, H):
    k = jax.random.split(key, 12)
    return {
        "w1": _xavier(k[0], 4 * H, H), "b1": _bias(k[1], 4 * H, H),
        "w2": _xavier(k[2], H, 1),     "b2": _bias(k[3], H, 1),
        "w":  _xavier(k[4], H, H),     "b_w": _bias(k[5], H, H),
        "u":  _xavier(k[6], H, H),     "b_u": _bias(k[7], H, H),
        "mw": _xavier(k[8], 3 * H, H), "b_m": _bias(k[9], 3 * H, H),
    }


# ----------------------------------------------------------------------------
# Pure-JAX reference (same math as the PyTorch module, high-precision matmuls)
# ----------------------------------------------------------------------------
def reference(facts, questions, prevM, params):
    S, B, H = facts.shape
    q = questions.reshape(B, H)
    m = prevM.reshape(B, H)
    dot = lambda a, b: jnp.dot(a, b, precision=lax.Precision.HIGHEST)

    logits = []
    for s in range(S):
        f = facts[s]
        z = jnp.concatenate([f * q, f * m, jnp.abs(f - q), jnp.abs(f - m)], axis=1)
        g = jnp.tanh(dot(z, params["w1"]) + params["b1"])
        logits.append(dot(g, params["w2"]) + params["b2"])     # (B,1)
    logits = jnp.concatenate(logits, axis=1).T                 # (S,B)
    gates = jax.nn.softmax(logits, axis=1)                     # implicit dim=1

    hidden = jnp.zeros((B, H), jnp.float32)
    for s in range(S):
        f = facts[s]
        gate = gates[s][:, None]
        h_hat = jnp.tanh(dot(f, params["w"]) + params["b_w"]
                         + dot(hidden, params["u"]) + params["b_u"])
        hidden = gate * h_hat + (1.0 - gate) * hidden

    concat = jnp.concatenate([m, hidden, q], axis=1)
    nextM = jnp.maximum(dot(concat, params["mw"]) + params["b_m"], 0.0)
    return nextM[None]


# ----------------------------------------------------------------------------
if __name__ == "__main__":
    H, S, B = 32, 8, 4
    key = jax.random.PRNGKey(0)
    k_f, k_q, k_m, k_p = jax.random.split(key, 4)

    facts = jax.random.normal(k_f, (S, B, H), jnp.float32)
    questions = jax.random.normal(k_q, (1, B, H), jnp.float32)
    prevM = jax.random.normal(k_m, (1, B, H), jnp.float32)
    params = init_params(k_p, H)
    wpack, bpack = pack_params(params)      # one-time packing, not per call

    out = memory_module(facts, questions, prevM, wpack, bpack)
    out = jax.block_until_ready(out)
    assert out.shape == (1, B, H)

    ref = jax.block_until_ready(reference(facts, questions, prevM, params))
    np.testing.assert_allclose(np.asarray(out), np.asarray(ref),
                               rtol=1e-3, atol=1e-3)
    print("KERNEL_OK")
</pallas_src>

<mosaic_0001>
module attributes {stable_mosaic.version = 11 : i64} {
  func.func @kernel(%arg0: memref<96x32xf32, #tpu.memory_space<vmem>>, %arg1: memref<288x64xf32, #tpu.memory_space<vmem>>, %arg2: memref<8x64xf32, #tpu.memory_space<vmem>>, %arg3: memref<4x32xf32, #tpu.memory_space<vmem>>) attributes {dimension_semantics = [], scalar_prefetch = 0 : i64, scratch_operands = 0 : i64, tpu.core_type = #tpu.core_type<tc>} {
    %c0 = arith.constant 0 : index
    %c0_0 = arith.constant 0 : index
    %0 = vector.load %arg0[%c0, %c0_0] : memref<96x32xf32, #tpu.memory_space<vmem>>, vector<32x32xf32>
    %c32 = arith.constant 32 : index
    %c0_1 = arith.constant 0 : index
    %1 = vector.load %arg0[%c32, %c0_1] : memref<96x32xf32, #tpu.memory_space<vmem>>, vector<32x32xf32>
    %c64 = arith.constant 64 : index
    %c0_2 = arith.constant 0 : index
    %2 = vector.load %arg0[%c64, %c0_2] : memref<96x32xf32, #tpu.memory_space<vmem>>, vector<32x32xf32>
    %3 = arith.mulf %0, %1 : vector<32x32xf32>
    %4 = arith.mulf %0, %2 : vector<32x32xf32>
    %5 = arith.subf %0, %1 : vector<32x32xf32>
    %6 = math.absf %5 : vector<32x32xf32>
    %7 = arith.subf %0, %2 : vector<32x32xf32>
    %8 = math.absf %7 : vector<32x32xf32>
    %9 = tpu.concatenate %3, %4, %6, %8, %0 in 1 : vector<32x32xf32>, vector<32x32xf32>, vector<32x32xf32>, vector<32x32xf32>, vector<32x32xf32> -> vector<32x160xf32>
    %c0_3 = arith.constant 0 : index
    %c0_4 = arith.constant 0 : index
    %10 = vector.load %arg1[%c0_3, %c0_4] : memref<288x64xf32, #tpu.memory_space<vmem>>, vector<160x64xf32>
    %cst = arith.constant dense<0.000000e+00> : vector<32x64xf32>
    %11 = tpu.matmul %9, %10, %cst {dimension_numbers = #tpu.dot_dimension_numbers<[1], [0], [0], [1], [0, 0, 1, 1], [], []>} : vector<32x160xf32>, vector<160x64xf32>, vector<32x64xf32> -> vector<32x64xf32>
    %c0_5 = arith.constant 0 : index
    %c0_6 = arith.constant 0 : index
    %12 = vector.load %arg2[%c0_5, %c0_6] : memref<8x64xf32, #tpu.memory_space<vmem>>, vector<1x64xf32>
    %13 = vector.broadcast %12 : vector<1x64xf32> to vector<32x64xf32>
    %14 = arith.addf %11, %13 : vector<32x64xf32>
    %15 = vector.shape_cast %14 : vector<32x64xf32> to vector<8x4x64xf32>
    %16 = vector.extract_strided_slice %15 {offsets = [0, 0, 0], sizes = [8, 4, 32], strides = [1, 1, 1]} : vector<8x4x64xf32> to vector<8x4x32xf32>
    %17 = math.tanh %16 : vector<8x4x32xf32>
    %18 = vector.extract_strided_slice %15 {offsets = [0, 0, 32], sizes = [8, 4, 32], strides = [1, 1, 1]} : vector<8x4x64xf32> to vector<8x4x32xf32>
    %c1 = arith.constant 1 : index
    %c0_7 = arith.constant 0 : index
    %19 = vector.load %arg2[%c1, %c0_7] : memref<8x64xf32, #tpu.memory_space<vmem>>, vector<1x32xf32>
    %c2 = arith.constant 2 : index
    %c0_8 = arith.constant 0 : index
    %20 = vector.load %arg2[%c2, %c0_8] : memref<8x64xf32, #tpu.memory_space<vmem>>, vector<1x1xf32>
    %21 = vector.shape_cast %19 : vector<1x32xf32> to vector<1x1x32xf32>
    %22 = vector.broadcast %21 : vector<1x1x32xf32> to vector<8x4x32xf32>
    %23 = arith.mulf %17, %22 : vector<8x4x32xf32>
    %cst_9 = arith.constant dense<0.000000e+00> : vector<8x4xf32>
    %24 = vector.multi_reduction <add>, %23, %cst_9 [2] : vector<8x4x32xf32> to vector<8x4xf32>
    %25 = vector.shape_cast %24 : vector<8x4xf32> to vector<8x4x1xf32>
    %26 = vector.shape_cast %20 : vector<1x1xf32> to vector<1x1x1xf32>
    %27 = vector.broadcast %26 : vector<1x1x1xf32> to vector<8x4x1xf32>
    %28 = arith.addf %25, %27 : vector<8x4x1xf32>
    %cst_10 = arith.constant dense<0xFF800000> : vector<8x1xf32>
    %29 = vector.multi_reduction <maximumf>, %28, %cst_10 [1] : vector<8x4x1xf32> to vector<8x1xf32>
    %30 = vector.shape_cast %29 : vector<8x1xf32> to vector<8x1x1xf32>
    %31 = vector.broadcast %30 : vector<8x1x1xf32> to vector<8x4x1xf32>
    %32 = arith.subf %28, %31 : vector<8x4x1xf32>
    %33 = math.exp %32 : vector<8x4x1xf32>
    %cst_11 = arith.constant dense<0.000000e+00> : vector<8x1xf32>
    %34 = vector.multi_reduction <add>, %33, %cst_11 [1] : vector<8x4x1xf32> to vector<8x1xf32>
    %35 = vector.shape_cast %34 : vector<8x1xf32> to vector<8x1x1xf32>
    %36 = tpu.reciprocal %35 {approx = true} : vector<8x1x1xf32> -> vector<8x1x1xf32>
    %37 = vector.broadcast %36 : vector<8x1x1xf32> to vector<8x4x1xf32>
    %38 = arith.mulf %33, %37 : vector<8x4x1xf32>
    %c160 = arith.constant 160 : index
    %c0_12 = arith.constant 0 : index
    %39 = vector.load %arg1[%c160, %c0_12] : memref<288x64xf32, #tpu.memory_space<vmem>>, vector<32x32xf32>
    %40 = vector.extract_strided_slice %18 {offsets = [0, 0, 0], sizes = [1, 4, 32], strides = [1, 1, 1]} : vector<8x4x32xf32> to vector<1x4x32xf32>
    %41 = vector.shape_cast %40 : vector<1x4x32xf32> to vector<4x32xf32>
    %42 = math.tanh %41 : vector<4x32xf32>
    %43 = vector.extract_strided_slice %38 {offsets = [0, 0, 0], sizes = [1, 4, 1], strides = [1, 1, 1]} : vector<8x4x1xf32> to vector<1x4x1xf32>
    %44 = vector.shape_cast %43 : vector<1x4x1xf32> to vector<4x1xf32>
    %45 = vector.broadcast %44 : vector<4x1xf32> to vector<4x32xf32>
    %46 = arith.mulf %45, %42 : vector<4x32xf32>
    %47 = vector.extract_strided_slice %18 {offsets = [1, 0, 0], sizes = [1, 4, 32], strides = [1, 1, 1]} : vector<8x4x32xf32> to vector<1x4x32xf32>
    %48 = vector.shape_cast %47 : vector<1x4x32xf32> to vector<4x32xf32>
    %cst_13 = arith.constant dense<0.000000e+00> : vector<4x32xf32>
    %49 = tpu.matmul %46, %39, %cst_13 {dimension_numbers = #tpu.dot_dimension_numbers<[1], [0], [0], [1], [0, 0, 1, 1], [], []>} : vector<4x32xf32>, vector<32x32xf32>, vector<4x32xf32> -> vector<4x32xf32>
    %50 = arith.addf %48, %49 : vector<4x32xf32>
    %51 = math.tanh %50 : vector<4x32xf32>
    %52 = vector.extract_strided_slice %38 {offsets = [1, 0, 0], sizes = [1, 4, 1], strides = [1, 1, 1]} : vector<8x4x1xf32> to vector<1x4x1xf32>
    %53 = vector.shape_cast %52 : vector<1x4x1xf32> to vector<4x1xf32>
    %54 = arith.subf %51, %46 : vector<4x32xf32>
    %55 = vector.broadcast %53 : vector<4x1xf32> to vector<4x32xf32>
    %56 = arith.mulf %55, %54 : vector<4x32xf32>
    %57 = arith.addf %46, %56 : vector<4x32xf32>
    %58 = vector.extract_strided_slice %18 {offsets = [2, 0, 0], sizes = [1, 4, 32], strides = [1, 1, 1]} : vector<8x4x32xf32> to vector<1x4x32xf32>
    %59 = vector.shape_cast %58 : vector<1x4x32xf32> to vector<4x32xf32>
    %cst_14 = arith.constant dense<0.000000e+00> : vector<4x32xf32>
    %60 = tpu.matmul %57, %39, %cst_14 {dimension_numbers = #tpu.dot_dimension_numbers<[1], [0], [0], [1], [0, 0, 1, 1], [], []>} : vector<4x32xf32>, vector<32x32xf32>, vector<4x32xf32> -> vector<4x32xf32>
    %61 = arith.addf %59, %60 : vector<4x32xf32>
    %62 = math.tanh %61 : vector<4x32xf32>
    %63 = vector.extract_strided_slice %38 {offsets = [2, 0, 0], sizes = [1, 4, 1], strides = [1, 1, 1]} : vector<8x4x1xf32> to vector<1x4x1xf32>
    %64 = vector.shape_cast %63 : vector<1x4x1xf32> to vector<4x1xf32>
    %65 = arith.subf %62, %57 : vector<4x32xf32>
    %66 = vector.broadcast %64 : vector<4x1xf32> to vector<4x32xf32>
    %67 = arith.mulf %66, %65 : vector<4x32xf32>
    %68 = arith.addf %57, %67 : vector<4x32xf32>
    %69 = vector.extract_strided_slice %18 {offsets = [3, 0, 0], sizes = [1, 4, 32], strides = [1, 1, 1]} : vector<8x4x32xf32> to vector<1x4x32xf32>
    %70 = vector.shape_cast %69 : vector<1x4x32xf32> to vector<4x32xf32>
    %cst_15 = arith.constant dense<0.000000e+00> : vector<4x32xf32>
    %71 = tpu.matmul %68, %39, %cst_15 {dimension_numbers = #tpu.dot_dimension_numbers<[1], [0], [0], [1], [0, 0, 1, 1], [], []>} : vector<4x32xf32>, vector<32x32xf32>, vector<4x32xf32> -> vector<4x32xf32>
    %72 = arith.addf %70, %71 : vector<4x32xf32>
    %73 = math.tanh %72 : vector<4x32xf32>
    %74 = vector.extract_strided_slice %38 {offsets = [3, 0, 0], sizes = [1, 4, 1], strides = [1, 1, 1]} : vector<8x4x1xf32> to vector<1x4x1xf32>
    %75 = vector.shape_cast %74 : vector<1x4x1xf32> to vector<4x1xf32>
    %76 = arith.subf %73, %68 : vector<4x32xf32>
    %77 = vector.broadcast %75 : vector<4x1xf32> to vector<4x32xf32>
    %78 = arith.mulf %77, %76 : vector<4x32xf32>
    %79 = arith.addf %68, %78 : vector<4x32xf32>
    %80 = vector.extract_strided_slice %18 {offsets = [4, 0, 0], sizes = [1, 4, 32], strides = [1, 1, 1]} : vector<8x4x32xf32> to vector<1x4x32xf32>
    %81 = vector.shape_cast %80 : vector<1x4x32xf32> to vector<4x32xf32>
    %cst_16 = arith.constant dense<0.000000e+00> : vector<4x32xf32>
    %82 = tpu.matmul %79, %39, %cst_16 {dimension_numbers = #tpu.dot_dimension_numbers<[1], [0], [0], [1], [0, 0, 1, 1], [], []>} : vector<4x32xf32>, vector<32x32xf32>, vector<4x32xf32> -> vector<4x32xf32>
    %83 = arith.addf %81, %82 : vector<4x32xf32>
    %84 = math.tanh %83 : vector<4x32xf32>
    %85 = vector.extract_strided_slice %38 {offsets = [4, 0, 0], sizes = [1, 4, 1], strides = [1, 1, 1]} : vector<8x4x1xf32> to vector<1x4x1xf32>
    %86 = vector.shape_cast %85 : vector<1x4x1xf32> to vector<4x1xf32>
    %87 = arith.subf %84, %79 : vector<4x32xf32>
    %88 = vector.broadcast %86 : vector<4x1xf32> to vector<4x32xf32>
    %89 = arith.mulf %88, %87 : vector<4x32xf32>
    %90 = arith.addf %79, %89 : vector<4x32xf32>
    %91 = vector.extract_strided_slice %18 {offsets = [5, 0, 0], sizes = [1, 4, 32], strides = [1, 1, 1]} : vector<8x4x32xf32> to vector<1x4x32xf32>
    %92 = vector.shape_cast %91 : vector<1x4x32xf32> to vector<4x32xf32>
    %cst_17 = arith.constant dense<0.000000e+00> : vector<4x32xf32>
    %93 = tpu.matmul %90, %39, %cst_17 {dimension_numbers = #tpu.dot_dimension_numbers<[1], [0], [0], [1], [0, 0, 1, 1], [], []>} : vector<4x32xf32>, vector<32x32xf32>, vector<4x32xf32> -> vector<4x32xf32>
    %94 = arith.addf %92, %93 : vector<4x32xf32>
    %95 = math.tanh %94 : vector<4x32xf32>
    %96 = vector.extract_strided_slice %38 {offsets = [5, 0, 0], sizes = [1, 4, 1], strides = [1, 1, 1]} : vector<8x4x1xf32> to vector<1x4x1xf32>
    %97 = vector.shape_cast %96 : vector<1x4x1xf32> to vector<4x1xf32>
    %98 = arith.subf %95, %90 : vector<4x32xf32>
    %99 = vector.broadcast %97 : vector<4x1xf32> to vector<4x32xf32>
    %100 = arith.mulf %99, %98 : vector<4x32xf32>
    %101 = arith.addf %90, %100 : vector<4x32xf32>
    %102 = vector.extract_strided_slice %18 {offsets = [6, 0, 0], sizes = [1, 4, 32], strides = [1, 1, 1]} : vector<8x4x32xf32> to vector<1x4x32xf32>
    %103 = vector.shape_cast %102 : vector<1x4x32xf32> to vector<4x32xf32>
    %cst_18 = arith.constant dense<0.000000e+00> : vector<4x32xf32>
    %104 = tpu.matmul %101, %39, %cst_18 {dimension_numbers = #tpu.dot_dimension_numbers<[1], [0], [0], [1], [0, 0, 1, 1], [], []>} : vector<4x32xf32>, vector<32x32xf32>, vector<4x32xf32> -> vector<4x32xf32>
    %105 = arith.addf %103, %104 : vector<4x32xf32>
    %106 = math.tanh %105 : vector<4x32xf32>
    %107 = vector.extract_strided_slice %38 {offsets = [6, 0, 0], sizes = [1, 4, 1], strides = [1, 1, 1]} : vector<8x4x1xf32> to vector<1x4x1xf32>
    %108 = vector.shape_cast %107 : vector<1x4x1xf32> to vector<4x1xf32>
    %109 = arith.subf %106, %101 : vector<4x32xf32>
    %110 = vector.broadcast %108 : vector<4x1xf32> to vector<4x32xf32>
    %111 = arith.mulf %110, %109 : vector<4x32xf32>
    %112 = arith.addf %101, %111 : vector<4x32xf32>
    %113 = vector.extract_strided_slice %18 {offsets = [7, 0, 0], sizes = [1, 4, 32], strides = [1, 1, 1]} : vector<8x4x32xf32> to vector<1x4x32xf32>
    %114 = vector.shape_cast %113 : vector<1x4x32xf32> to vector<4x32xf32>
    %cst_19 = arith.constant dense<0.000000e+00> : vector<4x32xf32>
    %115 = tpu.matmul %112, %39, %cst_19 {dimension_numbers = #tpu.dot_dimension_numbers<[1], [0], [0], [1], [0, 0, 1, 1], [], []>} : vector<4x32xf32>, vector<32x32xf32>, vector<4x32xf32> -> vector<4x32xf32>
    %116 = arith.addf %114, %115 : vector<4x32xf32>
    %117 = math.tanh %116 : vector<4x32xf32>
    %118 = vector.extract_strided_slice %38 {offsets = [7, 0, 0], sizes = [1, 4, 1], strides = [1, 1, 1]} : vector<8x4x1xf32> to vector<1x4x1xf32>
    %119 = vector.shape_cast %118 : vector<1x4x1xf32> to vector<4x1xf32>
    %120 = arith.subf %117, %112 : vector<4x32xf32>
    %121 = vector.broadcast %119 : vector<4x1xf32> to vector<4x32xf32>
    %122 = arith.mulf %121, %120 : vector<4x32xf32>
    %123 = arith.addf %112, %122 : vector<4x32xf32>
    %c32_20 = arith.constant 32 : index
    %c0_21 = arith.constant 0 : index
    %124 = vector.load %arg0[%c32_20, %c0_21] : memref<96x32xf32, #tpu.memory_space<vmem>>, vector<4x32xf32>
    %c64_22 = arith.constant 64 : index
    %c0_23 = arith.constant 0 : index
    %125 = vector.load %arg0[%c64_22, %c0_23] : memref<96x32xf32, #tpu.memory_space<vmem>>, vector<4x32xf32>
    %c192 = arith.constant 192 : index
    %c0_24 = arith.constant 0 : index
    %126 = vector.load %arg1[%c192, %c0_24] : memref<288x64xf32, #tpu.memory_space<vmem>>, vector<96x32xf32>
    %c3 = arith.constant 3 : index
    %c0_25 = arith.constant 0 : index
    %127 = vector.load %arg2[%c3, %c0_25] : memref<8x64xf32, #tpu.memory_space<vmem>>, vector<1x32xf32>
    %128 = tpu.concatenate %125, %123, %124 in 1 : vector<4x32xf32>, vector<4x32xf32>, vector<4x32xf32> -> vector<4x96xf32>
    %cst_26 = arith.constant dense<0.000000e+00> : vector<4x32xf32>
    %129 = tpu.matmul %128, %126, %cst_26 {dimension_numbers = #tpu.dot_dimension_numbers<[1], [0], [0], [1], [0, 0, 1, 1], [], []>} : vector<4x96xf32>, vector<96x32xf32>, vector<4x32xf32> -> vector<4x32xf32>
    %130 = vector.broadcast %127 : vector<1x32xf32> to vector<4x32xf32>
    %131 = arith.addf %129, %130 : vector<4x32xf32>
    %cst_27 = arith.constant 0.000000e+00 : f32
    %132 = vector.broadcast %cst_27 : f32 to vector<4x32xf32>
    %133 = arith.maximumf %131, %132 : vector<4x32xf32>
    %c0_28 = arith.constant 0 : index
    %c0_29 = arith.constant 0 : index
    %134 = vector.load %arg3[%c0_28, %c0_29] : memref<4x32xf32, #tpu.memory_space<vmem>>, vector<4x32xf32>
    tpu.vector_store %arg3[%c0_28, %c0_29], %133 {strides = array<i32>} : memref<4x32xf32, #tpu.memory_space<vmem>>, vector<4x32xf32>,
    return
  }
}

</mosaic_0001>

<llo_original>
// kernel: memory_module.1
$region0: #{memory_module.1}
  #allocation0 [shape = 'u32[]', space=smem, size = 0x4, offset = 0x4, fixed_abs, tag = 'smem constant byte address 0x4 - core index']
  #allocation1 [shape = 'u32[144,128]{1,0:T(1,128)}', space=vmem, size = 0x12000, scoped, tag = 'internal scratch']
  %s0 = inlined_call_operand.vmem [shape: f32[96,32], index: 0, kind: input, shape index: {}]
  %s1 = inlined_call_operand.vmem [shape: f32[288,64], index: 1, kind: input, shape index: {}]
  %s2 = inlined_call_operand.vmem [shape: f32[8,64], index: 2, kind: input, shape index: {}]
  %s3 = inlined_call_operand.hbm [shape: f32[4,32], index: 3, kind: output, shape index: {}]
  %s4 = sld [smem:[#allocation0]]
  $region22: #{memory_module.1} parent=0
    _
  %s6 = ssub.s32 1, %s4
  %s7 = scalar_select 0, %s6, %s4
  $region1: #{memory_module.1} parent=0
    #allocation2 [shape = 'u8[2048]{0}', space=vmem, size = 0x800, scoped, tag = 'output window, operand 0, single buffered']
    #allocation3 [shape = 's32[1]{0}', space=sflag, size = 0x4, scoped, tag = 'scoped memory for memory_module.1']
    %8 = vsyncpa [#allocation3], 0
    // Predicated region
    $region2: #{memory_module.1} parent=1 // pred_check
      _
    $region3: #{memory_module.1} parent=1 // pred_check_branch
      %10 = sbr.rel (0) target = $region5
    $region4: #{memory_module.1} parent=1 // pred_region
      _
    $region5: #{memory_module.1} parent=1 // pred_fallthru
      _
    // Predicated region
    $region6: #{memory_module.1} parent=1 // pred_check
      _
    $region7: #{memory_module.1} parent=1 // pred_check_branch
      %12 = sbr.rel (0) target = $region9
    $region8: #{memory_module.1} parent=1 // pred_region
      _
    $region9: #{memory_module.1} parent=1 // pred_fallthru
      _
    // Predicated region
    $region10: #{memory_module.1} parent=1 // pred_check
      _
    $region11: #{memory_module.1} parent=1 // pred_check_branch
      %14 = sbr.rel (0) target = $region13
    $region12: #{memory_module.1} parent=1 // pred_region
      _
    $region13: #{memory_module.1} parent=1 // pred_fallthru
      _
    %v15 = vld [vmem:[%s0] sm:$0xff]
    %v16 = vld [vmem:[%s0 + $0x8] sm:$0xff]
    %v17 = vld [vmem:[%s0 + $0x10] sm:$0xff]
    %v18 = vld [vmem:[%s0 + $0x18] sm:$0xff]
    %v19 = vld [vmem:[%s0 + $0x20] sm:$0xff]
    %v20 = vld [vmem:[%s0 + $0x28] sm:$0xff]
    %v21 = vld [vmem:[%s0 + $0x30] sm:$0xff]
    %v22 = vld [vmem:[%s0 + $0x38] sm:$0xff]
    %v23 = vld [vmem:[%s0 + $0x40] sm:$0xff]
    %v24 = vld [vmem:[%s0 + $0x48] sm:$0xff]
    %v25 = vld [vmem:[%s0 + $0x50] sm:$0xff]
    %v26 = vld [vmem:[%s0 + $0x58] sm:$0xff]
    %v27 = vmul.f32 %v15, %v19
    %v28 = vmul.f32 %v16, %v20
    %v29 = vmul.f32 %v17, %v21
    %v30 = vmul.f32 %v18, %v22
    %v31 = vmul.f32 %v15, %v23
    %v32 = vmul.f32 %v16, %v24
    %v33 = vmul.f32 %v17, %v25
    %v34 = vmul.f32 %v18, %v26
    %v35 = vsub.f32 %v15, %v19
    %v36 = vsub.f32 %v16, %v20
    %v37 = vsub.f32 %v17, %v21
    %v38 = vsub.f32 %v18, %v22
    %v39 = vand.u32 2147483647, %v35
    %v40 = vand.u32 2147483647, %v36
    %v41 = vand.u32 2147483647, %v37
    %v42 = vand.u32 2147483647, %v38
    %v43 = vsub.f32 %v15, %v23
    %v44 = vsub.f32 %v16, %v24
    %v45 = vsub.f32 %v17, %v25
    %v46 = vsub.f32 %v18, %v26
    %v47 = vand.u32 2147483647, %v43
    %v48 = vand.u32 2147483647, %v44
    %v49 = vand.u32 2147483647, %v45
    %v50 = vand.u32 2147483647, %v46
    %55 = vrot.lane.b32.xlu0 %v31, 32
    %v56 = vpop.permute.xlu0 %55
    %57 = vrot.lane.b32.xlu0 %v32, 32
    %v58 = vpop.permute.xlu0 %57
    %59 = vrot.lane.b32.xlu0 %v33, 32
    %v60 = vpop.permute.xlu0 %59
    %61 = vrot.lane.b32.xlu0 %v34, 32
    %v62 = vpop.permute.xlu0 %61
    %71 = vrot.lane.b32.xlu0 %v39, 64
    %v72 = vpop.permute.xlu0 %71
    %73 = vrot.lane.b32.xlu0 %v40, 64
    %v74 = vpop.permute.xlu0 %73
    %75 = vrot.lane.b32.xlu0 %v41, 64
    %v76 = vpop.permute.xlu0 %75
    %77 = vrot.lane.b32.xlu0 %v42, 64
    %v78 = vpop.permute.xlu0 %77
    %87 = vrot.lane.b32.xlu0 %v47, 96
    %v88 = vpop.permute.xlu0 %87
    %89 = vrot.lane.b32.xlu0 %v48, 96
    %v90 = vpop.permute.xlu0 %89
    %91 = vrot.lane.b32.xlu0 %v49, 96
    %v92 = vpop.permute.xlu0 %91
    %93 = vrot.lane.b32.xlu0 %v50, 96
    %v94 = vpop.permute.xlu0 %93
    %vm99 = vcmask 261120
    %v100 = vsel %vm99, %v27, %v56
    %v101 = vsel %vm99, %v28, %v58
    %v102 = vsel %vm99, %v29, %v60
    %v103 = vsel %vm99, %v30, %v62
    %vm104 = vcmask 523264
    %v105 = vsel %vm104, %v100, %v72
    %v106 = vsel %vm104, %v101, %v74
    %v107 = vsel %vm104, %v102, %v76
    %v108 = vsel %vm104, %v103, %v78
    %vm109 = vcmask 785408
    %v110 = vsel %vm109, %v105, %v88
    %v111 = vsel %vm109, %v106, %v90
    %v112 = vsel %vm109, %v107, %v92
    %v113 = vsel %vm109, %v108, %v94
    %v114 = vld [vmem:[%s1] sm:$0xff]
    %v115 = vld [vmem:[%s1 + $0x8] sm:$0xff]
    %v116 = vld [vmem:[%s1 + $0x10] sm:$0xff]
    %v117 = vld [vmem:[%s1 + $0x18] sm:$0xff]
    %v118 = vld [vmem:[%s1 + $0x20] sm:$0xff]
    %v119 = vld [vmem:[%s1 + $0x28] sm:$0xff]
    %v120 = vld [vmem:[%s1 + $0x30] sm:$0xff]
    %v121 = vld [vmem:[%s1 + $0x38] sm:$0xff]
    %v122 = vld [vmem:[%s1 + $0x40] sm:$0xff]
    %v123 = vld [vmem:[%s1 + $0x48] sm:$0xff]
    %v124 = vld [vmem:[%s1 + $0x50] sm:$0xff]
    %v125 = vld [vmem:[%s1 + $0x58] sm:$0xff]
    %v126 = vld [vmem:[%s1 + $0x60] sm:$0xff]
    %v127 = vld [vmem:[%s1 + $0x68] sm:$0xff]
    %v128 = vld [vmem:[%s1 + $0x70] sm:$0xff]
    %v129 = vld [vmem:[%s1 + $0x78] sm:$0xff]
    %v130 = vld [vmem:[%s1 + $0x80] sm:$0xff]
    %v131 = vld [vmem:[%s1 + $0x88] sm:$0xff]
    %v132 = vld [vmem:[%s1 + $0x90] sm:$0xff]
    %v133 = vld [vmem:[%s1 + $0x98] sm:$0xff]
    %v134 = vld [vmem:[%s2] sm:$0x1]
    %v135 = vlaneseq
    %v136 = vshrl.u32 %v135, 7
    %v137 = vsub.s32 0, %v136
    %v138 = vrot.slane %v134, %v137
    %v140 = vsel %vm99, %v15, 0
    %v143 = vsel %vm99, %v16, 0
    %v146 = vsel %vm99, %v17, 0
    %v149 = vsel %vm99, %v18, 0
    %151 = vmatprep.subr.mxu0 0.0
    %152 = vmatpush1.msra.mxu0 %v129
    %153 = vmatprep.subr.mxu0 0.0
    %154 = vmatpush1.msra.mxu0 %v128
    %155 = vmatprep.subr.mxu0 0.0
    %156 = vmatpush1.msra.mxu0 %v127
    %157 = vmatprep.subr.mxu0 0.0
    %158 = vmatpush1.msra.mxu0 %v126
    %159 = vmatprep.subr.mxu0 0.0
    %160 = vmatpush1.msra.mxu0 %v125
    %161 = vmatprep.subr.mxu0 0.0
    %162 = vmatpush1.msra.mxu0 %v124
    %163 = vmatprep.subr.mxu0 0.0
    %164 = vmatpush1.msra.mxu0 %v123
    %165 = vmatprep.subr.mxu0 0.0
    %166 = vmatpush1.msra.mxu0 %v122
    %167 = vmatprep.subr.mxu0 0.0
    %168 = vmatpush1.msra.mxu0 %v121
    %169 = vmatprep.subr.mxu0 0.0
    %170 = vmatpush1.msra.mxu0 %v120
    %171 = vmatprep.subr.mxu0 0.0
    %172 = vmatpush1.msra.mxu0 %v119
    %173 = vmatprep.subr.mxu0 0.0
    %174 = vmatpush1.msra.mxu0 %v118
    %175 = vmatprep.subr.mxu0 0.0
    %176 = vmatpush1.msra.mxu0 %v117
    %177 = vmatprep.subr.mxu0 0.0
    %178 = vmatpush1.msra.mxu0 %v116
    %179 = vmatprep.subr.mxu0 0.0
    %180 = vmatpush1.msra.mxu0 %v115
    %181 = vmatprep.subr.mxu0 0.0
    %182 = vmatpush1.msra.mxu0 %v114
    %183 = vmatprep.subr.mxu0 0.0
    %184 = vmatpush2.msra.mxu0 0.0
    %185 = vmatprep.subr.mxu0 0.0
    %186 = vmatpush2.msra.mxu0 0.0
    %187 = vmatprep.subr.mxu0 0.0
    %188 = vmatpush2.msra.mxu0 0.0
    %189 = vmatprep.subr.mxu0 0.0
    %190 = vmatpush2.msra.mxu0 0.0
    %191 = vmatprep.subr.mxu0 0.0
    %192 = vmatpush2.msra.mxu0 0.0
    %193 = vmatprep.subr.mxu0 0.0
    %194 = vmatpush2.msra.mxu0 0.0
    %195 = vmatprep.subr.mxu0 0.0
    %196 = vmatpush2.msra.mxu0 0.0
    %197 = vmatprep.subr.mxu0 0.0
    %198 = vmatpush2.msra.mxu0 0.0
    %199 = vmatprep.subr.mxu0 0.0
    %200 = vmatpush2.msra.mxu0 0.0
    %201 = vmatprep.subr.mxu0 0.0
    %202 = vmatpush2.msra.mxu0 0.0
    %203 = vmatprep.subr.mxu0 0.0
    %204 = vmatpush2.msra.mxu0 0.0
    %205 = vmatprep.subr.mxu0 0.0
    %206 = vmatpush2.msra.mxu0 0.0
    %207 = vmatprep.subr.mxu0 0.0
    %208 = vmatpush2.msra.mxu0 %v133
    %209 = vmatprep.subr.mxu0 0.0
    %210 = vmatpush2.msra.mxu0 %v132
    %211 = vmatprep.subr.mxu0 0.0
    %212 = vmatpush2.msra.mxu0 %v131
    %213 = vmatprep.subr.mxu0 0.0
    %214 = vmatpush2.msra.mxu0 %v130
    %215 = vmatprep.mubr.f32.mxu0 %v140
    %216 = vmatmul.mubr.f32.gmra.mxu0 %v110
    %v217 = vpop.f32.mrf.mxu0
    %v218 = vadd.f32 %v138, %v217
    %v219 = vpop.f32.mrf.mxu0
    %220 = vmatprep.mubr.f32.mxu0 %v143
    %221 = vmatmul.mubr.f32.gmra.mxu0 %v111
    %v222 = vpop.f32.mrf.mxu0
    %v223 = vadd.f32 %v138, %v222
    %v224 = vpop.f32.mrf.mxu0
    %225 = vmatprep.mubr.f32.mxu0 %v146
    %226 = vmatmul.mubr.f32.gmra.mxu0 %v112
    %v227 = vpop.f32.mrf.mxu0
    %v228 = vadd.f32 %v138, %v227
    %v229 = vpop.f32.mrf.mxu0
    %230 = vmatprep.mubr.f32.mxu0 %v149
    %231 = vmatmul.mubr.f32.gmra.mxu0 %v113
    %v232 = vpop.f32.mrf.mxu0
    %v233 = vadd.f32 %v138, %v232
    %v234 = vpop.f32.mrf.mxu0
    %235 = vdwg.mxu0
    %v240 = vcombine.high %v218, %v218
    %v241 = vcombine.high %v223, %v223
    %v242 = vcombine.high %v228, %v228
    %v243 = vcombine.high %v233, %v233
    %v248 = vtanh.pop %v218
    %v249 = vtanh.pop %v240
    %v250 = vtanh.pop %v223
    %v251 = vtanh.pop %v241
    %v252 = vtanh.pop %v228
    %v253 = vtanh.pop %v242
    %v254 = vtanh.pop %v233
    %v255 = vtanh.pop %v243
    %v256 = vld [vmem:[%s2 + $0x1] sm:$0x1]
    %v257 = vld [vmem:[%s2 + $0x2] sm:$0x1]
    %v258 = vlaneseq
    %v259 = vshrl.u32 %v258, 7
    %v260 = vsub.s32 0, %v259
    %v261 = vrot.slane %v256, %v260
    %v262 = vmul.f32 %v248, %v261
    %v263 = vmul.f32 %v249, %v261
    %v264 = vmul.f32 %v250, %v261
    %v265 = vmul.f32 %v251, %v261
    %v266 = vmul.f32 %v252, %v261
    %v267 = vmul.f32 %v253, %v261
    %v268 = vmul.f32 %v254, %v261
    %v269 = vmul.f32 %v255, %v261
    %vm270 = vcmask 257024
    %v271 = vsel %vm270, %v262, 0.0
    %272 = vadd.xlane.f32.xlu0 %v271
    %v273 = vpop.xlane.xlu0 %272
    %v274 = vsel %vm270, %v263, 0.0
    %275 = vadd.xlane.f32.xlu0 %v274
    %v276 = vpop.xlane.xlu0 %275
    %v277 = vsel %vm270, %v264, 0.0
    %278 = vadd.xlane.f32.xlu0 %v277
    %v279 = vpop.xlane.xlu0 %278
    %v280 = vsel %vm270, %v265, 0.0
    %281 = vadd.xlane.f32.xlu0 %v280
    %v282 = vpop.xlane.xlu0 %281
    %v283 = vsel %vm270, %v266, 0.0
    %284 = vadd.xlane.f32.xlu0 %v283
    %v285 = vpop.xlane.xlu0 %284
    %v286 = vsel %vm270, %v267, 0.0
    %287 = vadd.xlane.f32.xlu0 %v286
    %v288 = vpop.xlane.xlu0 %287
    %v289 = vsel %vm270, %v268, 0.0
    %290 = vadd.xlane.f32.xlu0 %v289
    %v291 = vpop.xlane.xlu0 %290
    %v292 = vsel %vm270, %v269, 0.0
    %293 = vadd.xlane.f32.xlu0 %v292
    %v294 = vpop.xlane.xlu0 %293
    %v295 = vlaneseq
    %v296 = vshrl.u32 %v295, 7
    %v297 = vsub.s32 0, %v296
    %v298 = vrot.slane %v257, %v297
    %v299 = vadd.f32 %v273, %v298
    %v300 = vadd.f32 %v276, %v298
    %v301 = vadd.f32 %v279, %v298
    %v302 = vadd.f32 %v282, %v298
    %v303 = vadd.f32 %v285, %v298
    %v304 = vadd.f32 %v288, %v298
    %v305 = vadd.f32 %v291, %v298
    %v306 = vadd.f32 %v294, %v298
    %vm307 = vcmask 3072
    %v308 = vsel %vm307, %v299, -inf
    %v309 = vrot.slane %v308, 4
    %v310 = vmax.f32 %v308, %v309
    %v311 = vrot.slane %v310, 2
    %v312 = vmax.f32 %v310, %v311
    %v313 = vrot.slane %v312, 1
    %v314 = vmax.f32 %v312, %v313
    %v315 = vsel %vm307, %v300, -inf
    %v316 = vrot.slane %v315, 4
    %v317 = vmax.f32 %v315, %v316
    %v318 = vrot.slane %v317, 2
    %v319 = vmax.f32 %v317, %v318
    %v320 = vrot.slane %v319, 1
    %v321 = vmax.f32 %v319, %v320
    %v322 = vsel %vm307, %v301, -inf
    %v323 = vrot.slane %v322, 4
    %v324 = vmax.f32 %v322, %v323
    %v325 = vrot.slane %v324, 2
    %v326 = vmax.f32 %v324, %v325
    %v327 = vrot.slane %v326, 1
    %v328 = vmax.f32 %v326, %v327
    %v329 = vsel %vm307, %v302, -inf
    %v330 = vrot.slane %v329, 4
    %v331 = vmax.f32 %v329, %v330
    %v332 = vrot.slane %v331, 2
    %v333 = vmax.f32 %v331, %v332
    %v334 = vrot.slane %v333, 1
    %v335 = vmax.f32 %v333, %v334
    %v336 = vsel %vm307, %v303, -inf
    %v337 = vrot.slane %v336, 4
    %v338 = vmax.f32 %v336, %v337
    %v339 = vrot.slane %v338, 2
    %v340 = vmax.f32 %v338, %v339
    %v341 = vrot.slane %v340, 1
    %v342 = vmax.f32 %v340, %v341
    %v343 = vsel %vm307, %v304, -inf
    %v344 = vrot.slane %v343, 4
    %v345 = vmax.f32 %v343, %v344
    %v346 = vrot.slane %v345, 2
    %v347 = vmax.f32 %v345, %v346
    %v348 = vrot.slane %v347, 1
    %v349 = vmax.f32 %v347, %v348
    %v350 = vsel %vm307, %v305, -inf
    %v351 = vrot.slane %v350, 4
    %v352 = vmax.f32 %v350, %v351
    %v353 = vrot.slane %v352, 2
    %v354 = vmax.f32 %v352, %v353
    %v355 = vrot.slane %v354, 1
    %v356 = vmax.f32 %v354, %v355
    %v357 = vsel %vm307, %v306, -inf
    %v358 = vrot.slane %v357, 4
    %v359 = vmax.f32 %v357, %v358
    %v360 = vrot.slane %v359, 2
    %v361 = vmax.f32 %v359, %v360
    %v362 = vrot.slane %v361, 1
    %v363 = vmax.f32 %v361, %v362
    %v364 = vsub.f32 %v299, %v314
    %v365 = vsub.f32 %v300, %v321
    %v366 = vsub.f32 %v301, %v328
    %v367 = vsub.f32 %v302, %v335
    %v368 = vsub.f32 %v303, %v342
    %v369 = vsub.f32 %v304, %v349
    %v370 = vsub.f32 %v305, %v356
    %v371 = vsub.f32 %v306, %v363
    %v372 = vmul.f32 %v364, 1.442695
    %v373 = vpow.pop %v372
    %v374 = vmul.f32 %v365, 1.442695
    %v375 = vpow.pop %v374
    %v376 = vmul.f32 %v366, 1.442695
    %v377 = vpow.pop %v376
    %v378 = vmul.f32 %v367, 1.442695
    %v379 = vpow.pop %v378
    %v380 = vmul.f32 %v368, 1.442695
    %v381 = vpow.pop %v380
    %v382 = vmul.f32 %v369, 1.442695
    %v383 = vpow.pop %v382
    %v384 = vmul.f32 %v370, 1.442695
    %v385 = vpow.pop %v384
    %v386 = vmul.f32 %v371, 1.442695
    %v387 = vpow.pop %v386
    %v388 = vsel %vm307, %v373, 0.0
    %v389 = vrot.slane %v388, 4
    %v390 = vadd.f32 %v388, %v389
    %v391 = vrot.slane %v390, 2
    %v392 = vadd.f32 %v390, %v391
    %v393 = vrot.slane %v392, 1
    %v394 = vadd.f32 %v392, %v393
    %v395 = vsel %vm307, %v375, 0.0
    %v396 = vrot.slane %v395, 4
    %v397 = vadd.f32 %v395, %v396
    %v398 = vrot.slane %v397, 2
    %v399 = vadd.f32 %v397, %v398
    %v400 = vrot.slane %v399, 1
    %v401 = vadd.f32 %v399, %v400
    %v402 = vsel %vm307, %v377, 0.0
    %v403 = vrot.slane %v402, 4
    %v404 = vadd.f32 %v402, %v403
    %v405 = vrot.slane %v404, 2
    %v406 = vadd.f32 %v404, %v405
    %v407 = vrot.slane %v406, 1
    %v408 = vadd.f32 %v406, %v407
    %v409 = vsel %vm307, %v379, 0.0
    %v410 = vrot.slane %v409, 4
    %v411 = vadd.f32 %v409, %v410
    %v412 = vrot.slane %v411, 2
    %v413 = vadd.f32 %v411, %v412
    %v414 = vrot.slane %v413, 1
    %v415 = vadd.f32 %v413, %v414
    %v416 = vsel %vm307, %v381, 0.0
    %v417 = vrot.slane %v416, 4
    %v418 = vadd.f32 %v416, %v417
    %v419 = vrot.slane %v418, 2
    %v420 = vadd.f32 %v418, %v419
    %v421 = vrot.slane %v420, 1
    %v422 = vadd.f32 %v420, %v421
    %v423 = vsel %vm307, %v383, 0.0
    %v424 = vrot.slane %v423, 4
    %v425 = vadd.f32 %v423, %v424
    %v426 = vrot.slane %v425, 2
    %v427 = vadd.f32 %v425, %v426
    %v428 = vrot.slane %v427, 1
    %v429 = vadd.f32 %v427, %v428
    %v430 = vsel %vm307, %v385, 0.0
    %v431 = vrot.slane %v430, 4
    %v432 = vadd.f32 %v430, %v431
    %v433 = vrot.slane %v432, 2
    %v434 = vadd.f32 %v432, %v433
    %v435 = vrot.slane %v434, 1
    %v436 = vadd.f32 %v434, %v435
    %v437 = vsel %vm307, %v387, 0.0
    %v438 = vrot.slane %v437, 4
    %v439 = vadd.f32 %v437, %v438
    %v440 = vrot.slane %v439, 2
    %v441 = vadd.f32 %v439, %v440
    %v442 = vrot.slane %v441, 1
    %v443 = vadd.f32 %v441, %v442
    %v444 = vrcp.pop %v394
    %v445 = vrcp.pop %v401
    %v446 = vrcp.pop %v408
    %v447 = vrcp.pop %v415
    %v448 = vrcp.pop %v422
    %v449 = vrcp.pop %v429
    %v450 = vrcp.pop %v436
    %v451 = vrcp.pop %v443
    %v452 = vmul.f32 %v373, %v444
    %v453 = vmul.f32 %v375, %v445
    %v454 = vmul.f32 %v377, %v446
    %v455 = vmul.f32 %v379, %v447
    %v456 = vmul.f32 %v381, %v448
    %v457 = vmul.f32 %v383, %v449
    %v458 = vmul.f32 %v385, %v450
    %v459 = vmul.f32 %v387, %v451
    %v460 = vld [vmem:[%s1 + $0xa0] sm:$0xff]
    %v461 = vld [vmem:[%s1 + $0xa8] sm:$0xff]
    %v462 = vld [vmem:[%s1 + $0xb0] sm:$0xff]
    %v463 = vld [vmem:[%s1 + $0xb8] sm:$0xff]
    %465 = vset.pattern.permute.xlu0 0
    %466 = vperm.xlu0 %465, %v452
    %v467 = vpop.permute.xlu0 %466
    %470 = vrot.lane.b32.xlu0 %v248, 96
    %v471 = vpop.permute.xlu0 %470
    %v473 = vmul.f32 %v467, %v471
    %v475 = vsel %vm99, %v473, 0
    %477 = vmatprep.subr.mxu0 0.0
    %478 = vmatpush1.msra.mxu0 0.0
    %479 = vmatprep.subr.mxu0 0.0
    %480 = vmatpush1.msra.mxu0 0.0
    %481 = vmatprep.subr.mxu0 0.0
    %482 = vmatpush1.msra.mxu0 0.0
    %483 = vmatprep.subr.mxu0 0.0
    %484 = vmatpush1.msra.mxu0 0.0
    %485 = vmatprep.subr.mxu0 0.0
    %486 = vmatpush1.msra.mxu0 0.0
    %487 = vmatprep.subr.mxu0 0.0
    %488 = vmatpush1.msra.mxu0 0.0
    %489 = vmatprep.subr.mxu0 0.0
    %490 = vmatpush1.msra.mxu0 0.0
    %491 = vmatprep.subr.mxu0 0.0
    %492 = vmatpush1.msra.mxu0 0.0
    %493 = vmatprep.subr.mxu0 0.0
    %494 = vmatpush1.msra.mxu0 0.0
    %495 = vmatprep.subr.mxu0 0.0
    %496 = vmatpush1.msra.mxu0 0.0
    %497 = vmatprep.subr.mxu0 0.0
    %498 = vmatpush1.msra.mxu0 0.0
    %499 = vmatprep.subr.mxu0 0.0
    %500 = vmatpush1.msra.mxu0 0.0
    %501 = vmatprep.subr.mxu0 0.0
    %502 = vmatpush1.msra.mxu0 %v463
    %503 = vmatprep.subr.mxu0 0.0
    %504 = vmatpush1.msra.mxu0 %v462
    %505 = vmatprep.subr.mxu0 0.0
    %506 = vmatpush1.msra.mxu0 %v461
    %507 = vmatprep.subr.mxu0 0.0
    %508 = vmatpush1.msra.mxu0 %v460
    %509 = vmatprep.subr.mxu0 0.0
    %510 = vmatpush2.msra.mxu0 0.0
    %511 = vmatprep.subr.mxu0 0.0
    %512 = vmatpush2.msra.mxu0 0.0
    %513 = vmatprep.subr.mxu0 0.0
    %514 = vmatpush2.msra.mxu0 0.0
    %515 = vmatprep.subr.mxu0 0.0
    %516 = vmatpush2.msra.mxu0 0.0
    %517 = vmatprep.subr.mxu0 0.0
    %518 = vmatpush2.msra.mxu0 0.0
    %519 = vmatprep.subr.mxu0 0.0
    %520 = vmatpush2.msra.mxu0 0.0
    %521 = vmatprep.subr.mxu0 0.0
    %522 = vmatpush2.msra.mxu0 0.0
    %523 = vmatprep.subr.mxu0 0.0
    %524 = vmatpush2.msra.mxu0 0.0
    %525 = vmatprep.subr.mxu0 0.0
    %526 = vmatpush2.msra.mxu0 0.0
    %527 = vmatprep.subr.mxu0 0.0
    %528 = vmatpush2.msra.mxu0 0.0
    %529 = vmatprep.subr.mxu0 0.0
    %530 = vmatpush2.msra.mxu0 0.0
    %531 = vmatprep.subr.mxu0 0.0
    %532 = vmatpush2.msra.mxu0 0.0
    %533 = vmatprep.subr.mxu0 0.0
    %534 = vmatpush2.msra.mxu0 0.0
    %535 = vmatprep.subr.mxu0 0.0
    %536 = vmatpush2.msra.mxu0 0.0
    %537 = vmatprep.subr.mxu0 0.0
    %538 = vmatpush2.msra.mxu0 0.0
    %539 = vmatprep.subr.mxu0 0.0
    %540 = vmatpush2.msra.mxu0 0.0
    %541 = vmatprep.mubr.f32.mxu0 0.0
    %542 = vmatmul.mubr.f32.gmra.mxu0 %v475
    %v543 = vpop.f32.mrf.mxu0
    %v544 = vadd.f32 0.0, %v543
    %v545 = vpop.f32.mrf.mxu0
    %546 = vdwg.mxu0
    %548 = vrot.lane.b32.xlu0 %v544, 32
    %v549 = vpop.permute.xlu0 %548
    %v551 = vadd.f32 %v240, %v549
    %v552 = vtanh.pop %v551
    %553 = vrot.lane.b32.xlu0 %v473, 32
    %v554 = vpop.permute.xlu0 %553
    %v556 = vsub.f32 %v552, %v554
    %558 = vset.pattern.permute.xlu0 0
    %559 = vperm.xlu0 %558, %v453
    %v560 = vpop.permute.xlu0 %559
    %563 = vrot.lane.b32.xlu0 %v556, 96
    %v564 = vpop.permute.xlu0 %563
    %v566 = vmul.f32 %v560, %v564
    %v567 = vadd.f32 %v473, %v566
    %v569 = vsel %vm99, %v567, 0
    %571 = vmatprep.subr.mxu0 0.0
    %572 = vmatpush1.msra.mxu0 0.0
    %573 = vmatprep.subr.mxu0 0.0
    %574 = vmatpush1.msra.mxu0 0.0
    %575 = vmatprep.subr.mxu0 0.0
    %576 = vmatpush1.msra.mxu0 0.0
    %577 = vmatprep.subr.mxu0 0.0
    %578 = vmatpush1.msra.mxu0 0.0
    %579 = vmatprep.subr.mxu0 0.0
    %580 = vmatpush1.msra.mxu0 0.0
    %581 = vmatprep.subr.mxu0 0.0
    %582 = vmatpush1.msra.mxu0 0.0
    %583 = vmatprep.subr.mxu0 0.0
    %584 = vmatpush1.msra.mxu0 0.0
    %585 = vmatprep.subr.mxu0 0.0
    %586 = vmatpush1.msra.mxu0 0.0
    %587 = vmatprep.subr.mxu0 0.0
    %588 = vmatpush1.msra.mxu0 0.0
    %589 = vmatprep.subr.mxu0 0.0
    %590 = vmatpush1.msra.mxu0 0.0
    %591 = vmatprep.subr.mxu0 0.0
    %592 = vmatpush1.msra.mxu0 0.0
    %593 = vmatprep.subr.mxu0 0.0
    %594 = vmatpush1.msra.mxu0 0.0
    %595 = vmatprep.subr.mxu0 0.0
    %596 = vmatpush1.msra.mxu0 %v463
    %597 = vmatprep.subr.mxu0 0.0
    %598 = vmatpush1.msra.mxu0 %v462
    %599 = vmatprep.subr.mxu0 0.0
    %600 = vmatpush1.msra.mxu0 %v461
    %601 = vmatprep.subr.mxu0 0.0
    %602 = vmatpush1.msra.mxu0 %v460
    %603 = vmatprep.subr.mxu0 0.0
    %604 = vmatpush2.msra.mxu0 0.0
    %605 = vmatprep.subr.mxu0 0.0
    %606 = vmatpush2.msra.mxu0 0.0
    %607 = vmatprep.subr.mxu0 0.0
    %608 = vmatpush2.msra.mxu0 0.0
    %609 = vmatprep.subr.mxu0 0.0
    %610 = vmatpush2.msra.mxu0 0.0
    %611 = vmatprep.subr.mxu0 0.0
    %612 = vmatpush2.msra.mxu0 0.0
    %613 = vmatprep.subr.mxu0 0.0
    %614 = vmatpush2.msra.mxu0 0.0
    %615 = vmatprep.subr.mxu0 0.0
    %616 = vmatpush2.msra.mxu0 0.0
    %617 = vmatprep.subr.mxu0 0.0
    %618 = vmatpush2.msra.mxu0 0.0
    %619 = vmatprep.subr.mxu0 0.0
    %620 = vmatpush2.msra.mxu0 0.0
    %621 = vmatprep.subr.mxu0 0.0
    %622 = vmatpush2.msra.mxu0 0.0
    %623 = vmatprep.subr.mxu0 0.0
    %624 = vmatpush2.msra.mxu0 0.0
    %625 = vmatprep.subr.mxu0 0.0
    %626 = vmatpush2.msra.mxu0 0.0
    %627 = vmatprep.subr.mxu0 0.0
    %628 = vmatpush2.msra.mxu0 0.0
    %629 = vmatprep.subr.mxu0 0.0
    %630 = vmatpush2.msra.mxu0 0.0
    %631 = vmatprep.subr.mxu0 0.0
    %632 = vmatpush2.msra.mxu0 0.0
    %633 = vmatprep.subr.mxu0 0.0
    %634 = vmatpush2.msra.mxu0 0.0
    %635 = vmatprep.mubr.f32.mxu0 0.0
    %636 = vmatmul.mubr.f32.gmra.mxu0 %v569
    %v637 = vpop.f32.mrf.mxu0
    %v638 = vadd.f32 0.0, %v637
    %v639 = vpop.f32.mrf.mxu0
    %640 = vdwg.mxu0
    %642 = vrot.lane.b32.xlu0 %v638, 32
    %v643 = vpop.permute.xlu0 %642
    %v645 = vadd.f32 %v223, %v643
    %v646 = vtanh.pop %v645
    %647 = vrot.lane.b32.xlu0 %v567, 32
    %v648 = vpop.permute.xlu0 %647
    %v650 = vsub.f32 %v646, %v648
    %652 = vset.pattern.permute.xlu0 0
    %653 = vperm.xlu0 %652, %v454
    %v654 = vpop.permute.xlu0 %653
    %657 = vrot.lane.b32.xlu0 %v650, 96
    %v658 = vpop.permute.xlu0 %657
    %v660 = vmul.f32 %v654, %v658
    %v661 = vadd.f32 %v567, %v660
    %v663 = vsel %vm99, %v661, 0
    %665 = vmatprep.subr.mxu0 0.0
    %666 = vmatpush1.msra.mxu0 0.0
    %667 = vmatprep.subr.mxu0 0.0
    %668 = vmatpush1.msra.mxu0 0.0
    %669 = vmatprep.subr.mxu0 0.0
    %670 = vmatpush1.msra.mxu0 0.0
    %671 = vmatprep.subr.mxu0 0.0
    %672 = vmatpush1.msra.mxu0 0.0
    %673 = vmatprep.subr.mxu0 0.0
    %674 = vmatpush1.msra.mxu0 0.0
    %675 = vmatprep.subr.mxu0 0.0
    %676 = vmatpush1.msra.mxu0 0.0
    %677 = vmatprep.subr.mxu0 0.0
    %678 = vmatpush1.msra.mxu0 0.0
    %679 = vmatprep.subr.mxu0 0.0
    %680 = vmatpush1.msra.mxu0 0.0
    %681 = vmatprep.subr.mxu0 0.0
    %682 = vmatpush1.msra.mxu0 0.0
    %683 = vmatprep.subr.mxu0 0.0
    %684 = vmatpush1.msra.mxu0 0.0
    %685 = vmatprep.subr.mxu0 0.0
    %686 = vmatpush1.msra.mxu0 0.0
    %687 = vmatprep.subr.mxu0 0.0
    %688 = vmatpush1.msra.mxu0 0.0
    %689 = vmatprep.subr.mxu0 0.0
    %690 = vmatpush1.msra.mxu0 %v463
    %691 = vmatprep.subr.mxu0 0.0
    %692 = vmatpush1.msra.mxu0 %v462
    %693 = vmatprep.subr.mxu0 0.0
    %694 = vmatpush1.msra.mxu0 %v461
    %695 = vmatprep.subr.mxu0 0.0
    %696 = vmatpush1.msra.mxu0 %v460
    %697 = vmatprep.subr.mxu0 0.0
    %698 = vmatpush2.msra.mxu0 0.0
    %699 = vmatprep.subr.mxu0 0.0
    %700 = vmatpush2.msra.mxu0 0.0
    %701 = vmatprep.subr.mxu0 0.0
    %702 = vmatpush2.msra.mxu0 0.0
    %703 = vmatprep.subr.mxu0 0.0
    %704 = vmatpush2.msra.mxu0 0.0
    %705 = vmatprep.subr.mxu0 0.0
    %706 = vmatpush2.msra.mxu0 0.0
    %707 = vmatprep.subr.mxu0 0.0
    %708 = vmatpush2.msra.mxu0 0.0
    %709 = vmatprep.subr.mxu0 0.0
    %710 = vmatpush2.msra.mxu0 0.0
    %711 = vmatprep.subr.mxu0 0.0
    %712 = vmatpush2.msra.mxu0 0.0
    %713 = vmatprep.subr.mxu0 0.0
    %714 = vmatpush2.msra.mxu0 0.0
    %715 = vmatprep.subr.mxu0 0.0
    %716 = vmatpush2.msra.mxu0 0.0
    %717 = vmatprep.subr.mxu0 0.0
    %718 = vmatpush2.msra.mxu0 0.0
    %719 = vmatprep.subr.mxu0 0.0
    %720 = vmatpush2.msra.mxu0 0.0
    %721 = vmatprep.subr.mxu0 0.0
    %722 = vmatpush2.msra.mxu0 0.0
    %723 = vmatprep.subr.mxu0 0.0
    %724 = vmatpush2.msra.mxu0 0.0
    %725 = vmatprep.subr.mxu0 0.0
    %726 = vmatpush2.msra.mxu0 0.0
    %727 = vmatprep.subr.mxu0 0.0
    %728 = vmatpush2.msra.mxu0 0.0
    %729 = vmatprep.mubr.f32.mxu0 0.0
    %730 = vmatmul.mubr.f32.gmra.mxu0 %v663
    %v731 = vpop.f32.mrf.mxu0
    %v732 = vadd.f32 0.0, %v731
    %v733 = vpop.f32.mrf.mxu0
    %734 = vdwg.mxu0
    %736 = vrot.lane.b32.xlu0 %v732, 32
    %v737 = vpop.permute.xlu0 %736
    %v739 = vadd.f32 %v241, %v737
    %v740 = vtanh.pop %v739
    %741 = vrot.lane.b32.xlu0 %v661, 32
    %v742 = vpop.permute.xlu0 %741
    %v744 = vsub.f32 %v740, %v742
    %746 = vset.pattern.permute.xlu0 0
    %747 = vperm.xlu0 %746, %v455
    %v748 = vpop.permute.xlu0 %747
    %751 = vrot.lane.b32.xlu0 %v744, 96
    %v752 = vpop.permute.xlu0 %751
    %v754 = vmul.f32 %v748, %v752
    %v755 = vadd.f32 %v661, %v754
    %v757 = vsel %vm99, %v755, 0
    %759 = vmatprep.subr.mxu0 0.0
    %760 = vmatpush1.msra.mxu0 0.0
    %761 = vmatprep.subr.mxu0 0.0
    %762 = vmatpush1.msra.mxu0 0.0
    %763 = vmatprep.subr.mxu0 0.0
    %764 = vmatpush1.msra.mxu0 0.0
    %765 = vmatprep.subr.mxu0 0.0
    %766 = vmatpush1.msra.mxu0 0.0
    %767 = vmatprep.subr.mxu0 0.0
    %768 = vmatpush1.msra.mxu0 0.0
    %769 = vmatprep.subr.mxu0 0.0
    %770 = vmatpush1.msra.mxu0 0.0
    %771 = vmatprep.subr.mxu0 0.0
    %772 = vmatpush1.msra.mxu0 0.0
    %773 = vmatprep.subr.mxu0 0.0
    %774 = vmatpush1.msra.mxu0 0.0
    %775 = vmatprep.subr.mxu0 0.0
    %776 = vmatpush1.msra.mxu0 0.0
    %777 = vmatprep.subr.mxu0 0.0
    %778 = vmatpush1.msra.mxu0 0.0
    %779 = vmatprep.subr.mxu0 0.0
    %780 = vmatpush1.msra.mxu0 0.0
    %781 = vmatprep.subr.mxu0 0.0
    %782 = vmatpush1.msra.mxu0 0.0
    %783 = vmatprep.subr.mxu0 0.0
    %784 = vmatpush1.msra.mxu0 %v463
    %785 = vmatprep.subr.mxu0 0.0
    %786 = vmatpush1.msra.mxu0 %v462
    %787 = vmatprep.subr.mxu0 0.0
    %788 = vmatpush1.msra.mxu0 %v461
    %789 = vmatprep.subr.mxu0 0.0
    %790 = vmatpush1.msra.mxu0 %v460
    %791 = vmatprep.subr.mxu0 0.0
    %792 = vmatpush2.msra.mxu0 0.0
    %793 = vmatprep.subr.mxu0 0.0
    %794 = vmatpush2.msra.mxu0 0.0
    %795 = vmatprep.subr.mxu0 0.0
    %796 = vmatpush2.msra.mxu0 0.0
    %797 = vmatprep.subr.mxu0 0.0
    %798 = vmatpush2.msra.mxu0 0.0
    %799 = vmatprep.subr.mxu0 0.0
    %800 = vmatpush2.msra.mxu0 0.0
    %801 = vmatprep.subr.mxu0 0.0
    %802 = vmatpush2.msra.mxu0 0.0
    %803 = vmatprep.subr.mxu0 0.0
    %804 = vmatpush2.msra.mxu0 0.0
    %805 = vmatprep.subr.mxu0 0.0
    %806 = vmatpush2.msra.mxu0 0.0
    %807 = vmatprep.subr.mxu0 0.0
    %808 = vmatpush2.msra.mxu0 0.0
    %809 = vmatprep.subr.mxu0 0.0
    %810 = vmatpush2.msra.mxu0 0.0
    %811 = vmatprep.subr.mxu0 0.0
    %812 = vmatpush2.msra.mxu0 0.0
    %813 = vmatprep.subr.mxu0 0.0
    %814 = vmatpush2.msra.mxu0 0.0
    %815 = vmatprep.subr.mxu0 0.0
    %816 = vmatpush2.msra.mxu0 0.0
    %817 = vmatprep.subr.mxu0 0.0
    %818 = vmatpush2.msra.mxu0 0.0
    %819 = vmatprep.subr.mxu0 0.0
    %820 = vmatpush2.msra.mxu0 0.0
    %821 = vmatprep.subr.mxu0 0.0
    %822 = vmatpush2.msra.mxu0 0.0
    %823 = vmatprep.mubr.f32.mxu0 0.0
    %824 = vmatmul.mubr.f32.gmra.mxu0 %v757
    %v825 = vpop.f32.mrf.mxu0
    %v826 = vadd.f32 0.0, %v825
    %v827 = vpop.f32.mrf.mxu0
    %828 = vdwg.mxu0
    %830 = vrot.lane.b32.xlu0 %v826, 32
    %v831 = vpop.permute.xlu0 %830
    %v833 = vadd.f32 %v228, %v831
    %v834 = vtanh.pop %v833
    %835 = vrot.lane.b32.xlu0 %v755, 32
    %v836 = vpop.permute.xlu0 %835
    %v838 = vsub.f32 %v834, %v836
    %840 = vset.pattern.permute.xlu0 0
    %841 = vperm.xlu0 %840, %v456
    %v842 = vpop.permute.xlu0 %841
    %845 = vrot.lane.b32.xlu0 %v838, 96
    %v846 = vpop.permute.xlu0 %845
    %v848 = vmul.f32 %v842, %v846
    %v849 = vadd.f32 %v755, %v848
    %v851 = vsel %vm99, %v849, 0
    %853 = vmatprep.subr.mxu0 0.0
    %854 = vmatpush1.msra.mxu0 0.0
    %855 = vmatprep.subr.mxu0 0.0
    %856 = vmatpush1.msra.mxu0 0.0
    %857 = vmatprep.subr.mxu0 0.0
    %858 = vmatpush1.msra.mxu0 0.0
    %859 = vmatprep.subr.mxu0 0.0
    %860 = vmatpush1.msra.mxu0 0.0
    %861 = vmatprep.subr.mxu0 0.0
    %862 = vmatpush1.msra.mxu0 0.0
    %863 = vmatprep.subr.mxu0 0.0
    %864 = vmatpush1.msra.mxu0 0.0
    %865 = vmatprep.subr.mxu0 0.0
    %866 = vmatpush1.msra.mxu0 0.0
    %867 = vmatprep.subr.mxu0 0.0
    %868 = vmatpush1.msra.mxu0 0.0
    %869 = vmatprep.subr.mxu0 0.0
    %870 = vmatpush1.msra.mxu0 0.0
    %871 = vmatprep.subr.mxu0 0.0
    %872 = vmatpush1.msra.mxu0 0.0
    %873 = vmatprep.subr.mxu0 0.0
    %874 = vmatpush1.msra.mxu0 0.0
    %875 = vmatprep.subr.mxu0 0.0
    %876 = vmatpush1.msra.mxu0 0.0
    %877 = vmatprep.subr.mxu0 0.0
    %878 = vmatpush1.msra.mxu0 %v463
    %879 = vmatprep.subr.mxu0 0.0
    %880 = vmatpush1.msra.mxu0 %v462
    %881 = vmatprep.subr.mxu0 0.0
    %882 = vmatpush1.msra.mxu0 %v461
    %883 = vmatprep.subr.mxu0 0.0
    %884 = vmatpush1.msra.mxu0 %v460
    %885 = vmatprep.subr.mxu0 0.0
    %886 = vmatpush2.msra.mxu0 0.0
    %887 = vmatprep.subr.mxu0 0.0
    %888 = vmatpush2.msra.mxu0 0.0
    %889 = vmatprep.subr.mxu0 0.0
    %890 = vmatpush2.msra.mxu0 0.0
    %891 = vmatprep.subr.mxu0 0.0
    %892 = vmatpush2.msra.mxu0 0.0
    %893 = vmatprep.subr.mxu0 0.0
    %894 = vmatpush2.msra.mxu0 0.0
    %895 = vmatprep.subr.mxu0 0.0
    %896 = vmatpush2.msra.mxu0 0.0
    %897 = vmatprep.subr.mxu0 0.0
    %898 = vmatpush2.msra.mxu0 0.0
    %899 = vmatprep.subr.mxu0 0.0
    %900 = vmatpush2.msra.mxu0 0.0
    %901 = vmatprep.subr.mxu0 0.0
    %902 = vmatpush2.msra.mxu0 0.0
    %903 = vmatprep.subr.mxu0 0.0
    %904 = vmatpush2.msra.mxu0 0.0
    %905 = vmatprep.subr.mxu0 0.0
    %906 = vmatpush2.msra.mxu0 0.0
    %907 = vmatprep.subr.mxu0 0.0
    %908 = vmatpush2.msra.mxu0 0.0
    %909 = vmatprep.subr.mxu0 0.0
    %910 = vmatpush2.msra.mxu0 0.0
    %911 = vmatprep.subr.mxu0 0.0
    %912 = vmatpush2.msra.mxu0 0.0
    %913 = vmatprep.subr.mxu0 0.0
    %914 = vmatpush2.msra.mxu0 0.0
    %915 = vmatprep.subr.mxu0 0.0
    %916 = vmatpush2.msra.mxu0 0.0
    %917 = vmatprep.mubr.f32.mxu0 0.0
    %918 = vmatmul.mubr.f32.gmra.mxu0 %v851
    %v919 = vpop.f32.mrf.mxu0
    %v920 = vadd.f32 0.0, %v919
    %v921 = vpop.f32.mrf.mxu0
    %922 = vdwg.mxu0
    %924 = vrot.lane.b32.xlu0 %v920, 32
    %v925 = vpop.permute.xlu0 %924
    %v927 = vadd.f32 %v242, %v925
    %v928 = vtanh.pop %v927
    %929 = vrot.lane.b32.xlu0 %v849, 32
    %v930 = vpop.permute.xlu0 %929
    %v932 = vsub.f32 %v928, %v930
    %934 = vset.pattern.permute.xlu0 0
    %935 = vperm.xlu0 %934, %v457
    %v936 = vpop.permute.xlu0 %935
    %939 = vrot.lane.b32.xlu0 %v932, 96
    %v940 = vpop.permute.xlu0 %939
    %v942 = vmul.f32 %v936, %v940
    %v943 = vadd.f32 %v849, %v942
    %v945 = vsel %vm99, %v943, 0
    %947 = vmatprep.subr.mxu0 0.0
    %948 = vmatpush1.msra.mxu0 0.0
    %949 = vmatprep.subr.mxu0 0.0
    %950 = vmatpush1.msra.mxu0 0.0
    %951 = vmatprep.subr.mxu0 0.0
    %952 = vmatpush1.msra.mxu0 0.0
    %953 = vmatprep.subr.mxu0 0.0
    %954 = vmatpush1.msra.mxu0 0.0
    %955 = vmatprep.subr.mxu0 0.0
    %956 = vmatpush1.msra.mxu0 0.0
    %957 = vmatprep.subr.mxu0 0.0
    %958 = vmatpush1.msra.mxu0 0.0
    %959 = vmatprep.subr.mxu0 0.0
    %960 = vmatpush1.msra.mxu0 0.0
    %961 = vmatprep.subr.mxu0 0.0
    %962 = vmatpush1.msra.mxu0 0.0
    %963 = vmatprep.subr.mxu0 0.0
    %964 = vmatpush1.msra.mxu0 0.0
    %965 = vmatprep.subr.mxu0 0.0
    %966 = vmatpush1.msra.mxu0 0.0
    %967 = vmatprep.subr.mxu0 0.0
    %968 = vmatpush1.msra.mxu0 0.0
    %969 = vmatprep.subr.mxu0 0.0
    %970 = vmatpush1.msra.mxu0 0.0
    %971 = vmatprep.subr.mxu0 0.0
    %972 = vmatpush1.msra.mxu0 %v463
    %973 = vmatprep.subr.mxu0 0.0
    %974 = vmatpush1.msra.mxu0 %v462
    %975 = vmatprep.subr.mxu0 0.0
    %976 = vmatpush1.msra.mxu0 %v461
    %977 = vmatprep.subr.mxu0 0.0
    %978 = vmatpush1.msra.mxu0 %v460
    %979 = vmatprep.subr.mxu0 0.0
    %980 = vmatpush2.msra.mxu0 0.0
    %981 = vmatprep.subr.mxu0 0.0
    %982 = vmatpush2.msra.mxu0 0.0
    %983 = vmatprep.subr.mxu0 0.0
    %984 = vmatpush2.msra.mxu0 0.0
    %985 = vmatprep.subr.mxu0 0.0
    %986 = vmatpush2.msra.mxu0 0.0
    %987 = vmatprep.subr.mxu0 0.0
    %988 = vmatpush2.msra.mxu0 0.0
    %989 = vmatprep.subr.mxu0 0.0
    %990 = vmatpush2.msra.mxu0 0.0
    %991 = vmatprep.subr.mxu0 0.0
    %992 = vmatpush2.msra.mxu0 0.0
    %993 = vmatprep.subr.mxu0 0.0
    %994 = vmatpush2.msra.mxu0 0.0
    %995 = vmatprep.subr.mxu0 0.0
    %996 = vmatpush2.msra.mxu0 0.0
    %997 = vmatprep.subr.mxu0 0.0
    %998 = vmatpush2.msra.mxu0 0.0
    %999 = vmatprep.subr.mxu0 0.0
    %1000 = vmatpush2.msra.mxu0 0.0
    %1001 = vmatprep.subr.mxu0 0.0
    %1002 = vmatpush2.msra.mxu0 0.0
    %1003 = vmatprep.subr.mxu0 0.0
    %1004 = vmatpush2.msra.mxu0 0.0
    %1005 = vmatprep.subr.mxu0 0.0
    %1006 = vmatpush2.msra.mxu0 0.0
    %1007 = vmatprep.subr.mxu0 0.0
    %1008 = vmatpush2.msra.mxu0 0.0
    %1009 = vmatprep.subr.mxu0 0.0
    %1010 = vmatpush2.msra.mxu0 0.0
    %1011 = vmatprep.mubr.f32.mxu0 0.0
    %1012 = vmatmul.mubr.f32.gmra.mxu0 %v945
    %v1013 = vpop.f32.mrf.mxu0
    %v1014 = vadd.f32 0.0, %v1013
    %v1015 = vpop.f32.mrf.mxu0
    %1016 = vdwg.mxu0
    %1018 = vrot.lane.b32.xlu0 %v1014, 32
    %v1019 = vpop.permute.xlu0 %1018
    %v1021 = vadd.f32 %v233, %v1019
    %v1022 = vtanh.pop %v1021
    %1023 = vrot.lane.b32.xlu0 %v943, 32
    %v1024 = vpop.permute.xlu0 %1023
    %v1026 = vsub.f32 %v1022, %v1024
    %1028 = vset.pattern.permute.xlu0 0
    %1029 = vperm.xlu0 %1028, %v458
    %v1030 = vpop.permute.xlu0 %1029
    %1033 = vrot.lane.b32.xlu0 %v1026, 96
    %v1034 = vpop.permute.xlu0 %1033
    %v1036 = vmul.f32 %v1030, %v1034
    %v1037 = vadd.f32 %v943, %v1036
    %v1039 = vsel %vm99, %v1037, 0
    %1041 = vmatprep.subr.mxu0 0.0
    %1042 = vmatpush1.msra.mxu0 0.0
    %1043 = vmatprep.subr.mxu0 0.0
    %1044 = vmatpush1.msra.mxu0 0.0
    %1045 = vmatprep.subr.mxu0 0.0
    %1046 = vmatpush1.msra.mxu0 0.0
    %1047 = vmatprep.subr.mxu0 0.0
    %1048 = vmatpush1.msra.mxu0 0.0
    %1049 = vmatprep.subr.mxu0 0.0
    %1050 = vmatpush1.msra.mxu0 0.0
    %1051 = vmatprep.subr.mxu0 0.0
    %1052 = vmatpush1.msra.mxu0 0.0
    %1053 = vmatprep.subr.mxu0 0.0
    %1054 = vmatpush1.msra.mxu0 0.0
    %1055 = vmatprep.subr.mxu0 0.0
    %1056 = vmatpush1.msra.mxu0 0.0
    %1057 = vmatprep.subr.mxu0 0.0
    %1058 = vmatpush1.msra.mxu0 0.0
    %1059 = vmatprep.subr.mxu0 0.0
    %1060 = vmatpush1.msra.mxu0 0.0
    %1061 = vmatprep.subr.mxu0 0.0
    %1062 = vmatpush1.msra.mxu0 0.0
    %1063 = vmatprep.subr.mxu0 0.0
    %1064 = vmatpush1.msra.mxu0 0.0
    %1065 = vmatprep.subr.mxu0 0.0
    %1066 = vmatpush1.msra.mxu0 %v463
    %1067 = vmatprep.subr.mxu0 0.0
    %1068 = vmatpush1.msra.mxu0 %v462
    %1069 = vmatprep.subr.mxu0 0.0
    %1070 = vmatpush1.msra.mxu0 %v461
    %1071 = vmatprep.subr.mxu0 0.0
    %1072 = vmatpush1.msra.mxu0 %v460
    %1073 = vmatprep.subr.mxu0 0.0
    %1074 = vmatpush2.msra.mxu0 0.0
    %1075 = vmatprep.subr.mxu0 0.0
    %1076 = vmatpush2.msra.mxu0 0.0
    %1077 = vmatprep.subr.mxu0 0.0
    %1078 = vmatpush2.msra.mxu0 0.0
    %1079 = vmatprep.subr.mxu0 0.0
    %1080 = vmatpush2.msra.mxu0 0.0
    %1081 = vmatprep.subr.mxu0 0.0
    %1082 = vmatpush2.msra.mxu0 0.0
    %1083 = vmatprep.subr.mxu0 0.0
    %1084 = vmatpush2.msra.mxu0 0.0
    %1085 = vmatprep.subr.mxu0 0.0
    %1086 = vmatpush2.msra.mxu0 0.0
    %1087 = vmatprep.subr.mxu0 0.0
    %1088 = vmatpush2.msra.mxu0 0.0
    %1089 = vmatprep.subr.mxu0 0.0
    %1090 = vmatpush2.msra.mxu0 0.0
    %1091 = vmatprep.subr.mxu0 0.0
    %1092 = vmatpush2.msra.mxu0 0.0
    %1093 = vmatprep.subr.mxu0 0.0
    %1094 = vmatpush2.msra.mxu0 0.0
    %1095 = vmatprep.subr.mxu0 0.0
    %1096 = vmatpush2.msra.mxu0 0.0
    %1097 = vmatprep.subr.mxu0 0.0
    %1098 = vmatpush2.msra.mxu0 0.0
    %1099 = vmatprep.subr.mxu0 0.0
    %1100 = vmatpush2.msra.mxu0 0.0
    %1101 = vmatprep.subr.mxu0 0.0
    %1102 = vmatpush2.msra.mxu0 0.0
    %1103 = vmatprep.subr.mxu0 0.0
    %1104 = vmatpush2.msra.mxu0 0.0
    %1105 = vmatprep.mubr.f32.mxu0 0.0
    %1106 = vmatmul.mubr.f32.gmra.mxu0 %v1039
    %v1107 = vpop.f32.mrf.mxu0
    %v1108 = vadd.f32 0.0, %v1107
    %v1109 = vpop.f32.mrf.mxu0
    %1110 = vdwg.mxu0
    %1112 = vrot.lane.b32.xlu0 %v1108, 32
    %v1113 = vpop.permute.xlu0 %1112
    %v1115 = vadd.f32 %v243, %v1113
    %v1116 = vtanh.pop %v1115
    %1117 = vrot.lane.b32.xlu0 %v1037, 32
    %v1118 = vpop.permute.xlu0 %1117
    %v1120 = vsub.f32 %v1116, %v1118
    %1122 = vset.pattern.permute.xlu0 0
    %1123 = vperm.xlu0 %1122, %v459
    %v1124 = vpop.permute.xlu0 %1123
    %1127 = vrot.lane.b32.xlu0 %v1120, 96
    %v1128 = vpop.permute.xlu0 %1127
    %v1130 = vmul.f32 %v1124, %v1128
    %v1131 = vadd.f32 %v1037, %v1130
    %v1132 = vld [vmem:[%s0 + $0x20] sm:$0xf]
    %v1133 = vld [vmem:[%s0 + $0x40] sm:$0xf]
    %v1134 = vld [vmem:[%s1 + $0xc0] sm:$0xff]
    %v1135 = vld [vmem:[%s1 + $0xc8] sm:$0xff]
    %v1136 = vld [vmem:[%s1 + $0xd0] sm:$0xff]
    %v1137 = vld [vmem:[%s1 + $0xd8] sm:$0xff]
    %v1138 = vld [vmem:[%s1 + $0xe0] sm:$0xff]
    %v1139 = vld [vmem:[%s1 + $0xe8] sm:$0xff]
    %v1140 = vld [vmem:[%s1 + $0xf0] sm:$0xff]
    %v1141 = vld [vmem:[%s1 + $0xf8] sm:$0xff]
    %v1142 = vld [vmem:[%s1 + $0x100] sm:$0xff]
    %v1143 = vld [vmem:[%s1 + $0x108] sm:$0xff]
    %v1144 = vld [vmem:[%s1 + $0x110] sm:$0xff]
    %v1145 = vld [vmem:[%s1 + $0x118] sm:$0xff]
    %v1146 = vld [vmem:[%s2 + $0x3] sm:$0x1]
    %1148 = vrot.lane.b32.xlu0 %v1131, 32
    %v1149 = vpop.permute.xlu0 %1148
    %1152 = vrot.lane.b32.xlu0 %v1132, 64
    %v1153 = vpop.permute.xlu0 %1152
    %v1155 = vsel %vm99, %v1133, %v1149
    %v1156 = vsel %vm104, %v1155, %v1153
    %v1157 = vlaneseq
    %v1158 = vshrl.u32 %v1157, 7
    %v1159 = vsub.s32 0, %v1158
    %v1160 = vrot.slane %v1146, %v1159
    %v1162 = vsel %vm109, %v1156, 0
    %1164 = vmatprep.subr.mxu0 0.0
    %1165 = vmatpush1.msra.mxu0 0.0
    %1166 = vmatprep.subr.mxu0 0.0
    %1167 = vmatpush1.msra.mxu0 0.0
    %1168 = vmatprep.subr.mxu0 0.0
    %1169 = vmatpush1.msra.mxu0 0.0
    %1170 = vmatprep.subr.mxu0 0.0
    %1171 = vmatpush1.msra.mxu0 0.0
    %1172 = vmatprep.subr.mxu0 0.0
    %1173 = vmatpush1.msra.mxu0 %v1145
    %1174 = vmatprep.subr.mxu0 0.0
    %1175 = vmatpush1.msra.mxu0 %v1144
    %1176 = vmatprep.subr.mxu0 0.0
    %1177 = vmatpush1.msra.mxu0 %v1143
    %1178 = vmatprep.subr.mxu0 0.0
    %1179 = vmatpush1.msra.mxu0 %v1142
    %1180 = vmatprep.subr.mxu0 0.0
    %1181 = vmatpush1.msra.mxu0 %v1141
    %1182 = vmatprep.subr.mxu0 0.0
    %1183 = vmatpush1.msra.mxu0 %v1140
    %1184 = vmatprep.subr.mxu0 0.0
    %1185 = vmatpush1.msra.mxu0 %v1139
    %1186 = vmatprep.subr.mxu0 0.0
    %1187 = vmatpush1.msra.mxu0 %v1138
    %1188 = vmatprep.subr.mxu0 0.0
    %1189 = vmatpush1.msra.mxu0 %v1137
    %1190 = vmatprep.subr.mxu0 0.0
    %1191 = vmatpush1.msra.mxu0 %v1136
    %1192 = vmatprep.subr.mxu0 0.0
    %1193 = vmatpush1.msra.mxu0 %v1135
    %1194 = vmatprep.subr.mxu0 0.0
    %1195 = vmatpush1.msra.mxu0 %v1134
    %1196 = vmatprep.subr.mxu0 0.0
    %1197 = vmatpush2.msra.mxu0 0.0
    %1198 = vmatprep.subr.mxu0 0.0
    %1199 = vmatpush2.msra.mxu0 0.0
    %1200 = vmatprep.subr.mxu0 0.0
    %1201 = vmatpush2.msra.mxu0 0.0
    %1202 = vmatprep.subr.mxu0 0.0
    %1203 = vmatpush2.msra.mxu0 0.0
    %1204 = vmatprep.subr.mxu0 0.0
    %1205 = vmatpush2.msra.mxu0 0.0
    %1206 = vmatprep.subr.mxu0 0.0
    %1207 = vmatpush2.msra.mxu0 0.0
    %1208 = vmatprep.subr.mxu0 0.0
    %1209 = vmatpush2.msra.mxu0 0.0
    %1210 = vmatprep.subr.mxu0 0.0
    %1211 = vmatpush2.msra.mxu0 0.0
    %1212 = vmatprep.subr.mxu0 0.0
    %1213 = vmatpush2.msra.mxu0 0.0
    %1214 = vmatprep.subr.mxu0 0.0
    %1215 = vmatpush2.msra.mxu0 0.0
    %1216 = vmatprep.subr.mxu0 0.0
    %1217 = vmatpush2.msra.mxu0 0.0
    %1218 = vmatprep.subr.mxu0 0.0
    %1219 = vmatpush2.msra.mxu0 0.0
    %1220 = vmatprep.subr.mxu0 0.0
    %1221 = vmatpush2.msra.mxu0 0.0
    %1222 = vmatprep.subr.mxu0 0.0
    %1223 = vmatpush2.msra.mxu0 0.0
    %1224 = vmatprep.subr.mxu0 0.0
    %1225 = vmatpush2.msra.mxu0 0.0
    %1226 = vmatprep.subr.mxu0 0.0
    %1227 = vmatpush2.msra.mxu0 0.0
    %1228 = vmatprep.mubr.f32.mxu0 0.0
    %1229 = vmatmul.mubr.f32.gmra.mxu0 %v1162
    %v1230 = vpop.f32.mrf.mxu0
    %v1231 = vadd.f32 %v1160, %v1230
    %v1232 = vpop.f32.mrf.mxu0
    %1233 = vdwg.mxu0
    %v1234 = vmax.f32 %v1231, 0.0
    %1235 = vst.msk [vmem:[#allocation2] sm:$0xf] %vm270, %v1234
    // Predicated region
    $region14: #{memory_module.1} parent=1 // pred_check
      _
    $region15: #{memory_module.1} parent=1 // pred_check_branch
      %1237 = sbr.rel (0) target = $region17
    $region16: #{memory_module.1} parent=1 // pred_region
      %s1239 = ssub.s32 64, 64
      %1240 = vsyncadd [#allocation3], %s1239
      %s1242 = sshll.u32 [#allocation2], 4
      %s1243 = int_to_ptr.vmem [resolvable:$true] %s1242
      %1245 = dma.vmem_to_hbm [thread:$0]  %s1243, 64, %s3, [#allocation3]
    $region17: #{memory_module.1} parent=1 // pred_fallthru
      _
    // Predicated region
    $region18: #{memory_module.1} parent=1 // pred_check
      _
    $region19: #{memory_module.1} parent=1 // pred_check_branch
      %1247 = sbr.rel (0) target = $region21
    $region20: #{memory_module.1} parent=1 // pred_region
      %1248 = dma.done [#allocation3], 64
    $region21: #{memory_module.1} parent=1 // pred_fallthru
      _
    %1249 = vsyncpa [#allocation3], 1

</llo_original>
